<compile_context>
chip_gen: v6e
topology: v6e:2x2x1
jax: 0.10.0
libtpu: 0.0.40
codegen_flags: <defaults>
</compile_context>

<pallas_src>
import functools

import jax
import jax.numpy as jnp
from jax.experimental import pallas as pl
from jax.experimental.pallas import tpu as pltpu

THRESH = 0.5
EPS = 1e-5


def _vmem_limit_bytes():
    """Generation-aware VMEM budget (<= ~48 MiB on v7x, ~96 MiB on v5e/v6e)."""
    cap = 64 * 1024 * 1024                      # conservative fallback (v7x)
    try:
        cap = int(pltpu.get_tpu_info().vmem_capacity_bytes)
    except Exception:                           # best-effort query only
        pass
    return min(int(cap * 3 // 4), 100 * 1024 * 1024)


def _choose_tiling(B, M, itemsize, tile_budget):
    """Pick (tb, nb, pad_rows): tb * nb == B + pad_rows, tb a multiple of 8
    (or the whole row count), each (tb, M) block within tile_budget bytes."""
    row_bytes = max(1, M * itemsize)
    if B * row_bytes <= tile_budget:
        return B, 1, 0                           # single block, no padding
    max_rows = max(8, (tile_budget // row_bytes) // 8 * 8)
    pad = (-B) % 8                               # avoid degenerate tb (B prime)
    Bp = B + pad
    best_any, best_even = 0, 0
    cand = 8
    while cand <= min(max_rows, Bp):
        if Bp % cand == 0:
            best_any = cand
            if (Bp // cand) % 2 == 0:            # even block count -> 2-core split
                best_even = cand
        cand += 8
    tb = best_even if best_even else best_any    # cand = 8 always divides Bp
    return tb, Bp // tb, pad


def _stats_kernel(x_ref, sum_ref, sq_ref):
    """Accumulate per-lane sum / sum-of-squares over the inner grid axis.

    x_ref:   (tb, M) input tile.
    sum_ref, sq_ref: (1, 1, M) f32 per-core partial accumulators.  Their
        block index depends only on the outer "parallel" axis, so the block
        stays resident in VMEM across the inner "arbitrary" axis.
    """
    j = pl.program_id(1)

    @pl.when(j == 0)
    def _init():
        sum_ref[...] = jnp.zeros_like(sum_ref)
        sq_ref[...] = jnp.zeros_like(sq_ref)

    x = x_ref[...].astype(jnp.float32)                       # (tb, M)
    # Sublane (XLU) reductions are free filler in this HBM-bound loop.
    sum_ref[...] += jnp.sum(x, axis=0, keepdims=True)[None]  # (1, 1, M)
    sq_ref[...] += jnp.sum(x * x, axis=0, keepdims=True)[None]


def _normalize_kernel(x_ref, scale_ref, shift_ref, o_ref):
    """y = x * scale + shift, scale/shift pre-broadcast to a (1, M) row."""
    x = x_ref[...].astype(scale_ref.dtype)
    o_ref[...] = (x * scale_ref[...] + shift_ref[...]).astype(o_ref.dtype)


@functools.partial(jax.jit, static_argnames=("eps", "tile_budget"))
def batch_norm_2d1(x, weight, bias, eps=EPS, tile_budget=None):
    """x: (T, N, C, H, W); weight, bias: (C,). Returns (T, N, C, H, W)."""
    T, N, C, H, W = x.shape
    B, L = T * N, H * W
    M = C * L

    vmem_limit = _vmem_limit_bytes()
    if tile_budget is None:
        # Pass 2 holds ~2 input + 2 output blocks (double-buffered) plus
        # temporaries; keep plenty of headroom inside vmem_limit.
        tile_budget = max(1 << 20, vmem_limit // 8)

    itemsize = jnp.dtype(x.dtype).itemsize
    tb, nb, pad = _choose_tiling(B, M, itemsize, tile_budget)

    # Free contiguous reshape: rows = T*N, lanes = channel-major C*H*W.
    x2 = x.reshape(B, M)
    if pad:
        # TODO(synk): zero-padding costs one extra copy of x; only taken when
        # T*N is not a multiple of 8.  Zero rows do not perturb the statistics
        # because the true element count is used below.
        x2 = jnp.pad(x2, ((0, pad), (0, 0)))
    Bp = B + pad

    # Outer "parallel" axis so the stats pass can use both v7x TensorCores.
    P = 2 if (nb % 2 == 0 and nb >= 2) else 1
    inner = nb // P

    # ---- Pass 1: per-core, per-lane sum / sum-of-squares ----
    sums, sqs = pl.pallas_call(
        _stats_kernel,
        out_shape=(jax.ShapeDtypeStruct((P, 1, M), jnp.float32),
                   jax.ShapeDtypeStruct((P, 1, M), jnp.float32)),
        grid_spec=pltpu.PrefetchScalarGridSpec(
            num_scalar_prefetch=0,
            grid=(P, inner),
            in_specs=[
                pl.BlockSpec((tb, M), lambda p, j: (p * inner + j, 0)),
            ],
            out_specs=(
                pl.BlockSpec((1, 1, M), lambda p, j: (p, 0, 0)),
                pl.BlockSpec((1, 1, M), lambda p, j: (p, 0, 0)),
            ),
        ),
        compiler_params=pltpu.CompilerParams(
            dimension_semantics=("parallel", "arbitrary"),
            vmem_limit_bytes=vmem_limit,
        ),
    )(x2)

    # ---- Tiny finalize in plain JAX: per-channel mean/var -> scale/shift ----
    inv_count = 1.0 / float(B * L)
    tot = jnp.sum(sums, axis=(0, 1))                 # (M,)
    tot_sq = jnp.sum(sqs, axis=(0, 1))               # (M,)
    ch_sum = tot.reshape(C, L).sum(axis=1)           # (C,)
    ch_sq = tot_sq.reshape(C, L).sum(axis=1)         # (C,)
    mean = ch_sum * inv_count
    var = jnp.maximum(ch_sq * inv_count - mean * mean, 0.0)   # biased variance
    inv_std = jax.lax.rsqrt(var + eps)
    scale = weight.astype(jnp.float32) * inv_std               # (C,)
    shift = bias.astype(jnp.float32) - mean * scale            # (C,)

    # bf16 inputs keep the elementwise pass in bf16 (halves vreg pressure);
    # everything else computes in f32.
    compute_dtype = jnp.bfloat16 if x.dtype == jnp.bfloat16 else jnp.float32
    scale_row = jnp.repeat(scale, L).reshape(1, M).astype(compute_dtype)
    shift_row = jnp.repeat(shift, L).reshape(1, M).astype(compute_dtype)

    # ---- Pass 2: elementwise normalize (lane-dense, embarrassingly parallel) ----
    y2 = pl.pallas_call(
        _normalize_kernel,
        out_shape=jax.ShapeDtypeStruct((Bp, M), x.dtype),
        grid_spec=pltpu.PrefetchScalarGridSpec(
            num_scalar_prefetch=0,
            grid=(nb,),
            in_specs=[
                pl.BlockSpec((tb, M), lambda i: (i, 0)),
                pl.BlockSpec((1, M), lambda i: (0, 0)),
                pl.BlockSpec((1, M), lambda i: (0, 0)),
            ],
            out_specs=pl.BlockSpec((tb, M), lambda i: (i, 0)),
        ),
        compiler_params=pltpu.CompilerParams(
            dimension_semantics=("parallel",),
            vmem_limit_bytes=vmem_limit,
        ),
    )(x2, scale_row, shift_row)

    if pad:
        y2 = y2[:B]
    return y2.reshape(T, N, C, H, W)


def _reference(x, weight, bias, eps=EPS):
    """Pure-JAX reference of the same training-mode batch norm."""
    xf = x.astype(jnp.float32)
    axes = (0, 1, 3, 4)                 # reduce over T, N, H, W (channel = dim 2)
    mean = jnp.mean(xf, axis=axes, keepdims=True)
    var = jnp.mean((xf - mean) ** 2, axis=axes, keepdims=True)
    w = weight.reshape(1, 1, -1, 1, 1).astype(jnp.float32)
    b = bias.reshape(1, 1, -1, 1, 1).astype(jnp.float32)
    return ((xf - mean) * jax.lax.rsqrt(var + eps) * w + b).astype(x.dtype)


def _check(x, weight, bias, tile_budget=None):
    y = jax.block_until_ready(
        batch_norm_2d1(x, weight, bias, tile_budget=tile_budget))
    y_ref = _reference(x, weight, bias)
    assert y.shape == x.shape
    err = float(jnp.max(jnp.abs(y.astype(jnp.float32) - y_ref.astype(jnp.float32))))
    assert err < 1e-4, err


if __name__ == "__main__":
    key = jax.random.PRNGKey(0)
    k0, k1, k2, k3 = jax.random.split(key, 4)

    # 1) Module-faithful init: T=4 timesteps, batch=2, C=4, 8x8 spatial,
    #    weight = 0.2 * thresh = 0.1, bias = 0 (BatchNorm3d2.reset_parameters).
    T, N, C, H, W = 4, 2, 4, 8, 8
    x = jax.random.normal(k0, (T, N, C, H, W), dtype=jnp.float32)
    weight = jnp.full((C,), 0.2 * THRESH, dtype=jnp.float32)
    bias = jnp.zeros((C,), dtype=jnp.float32)
    _check(x, weight, bias)

    # 2) Non-trivial affine params + L = 49 (not a multiple of 128) to
    #    exercise the lane-dense layout path.
    T, N, C, H, W = 3, 3, 4, 7, 7
    x = jax.random.normal(k1, (T, N, C, H, W), dtype=jnp.float32) * 2.0 + 0.5
    weight = jax.random.normal(k2, (C,), dtype=jnp.float32)
    bias = jax.random.normal(k3, (C,), dtype=jnp.float32)
    _check(x, weight, bias)

    # 3) Tiny forced tile budget: exercises multi-block tiling, zero-row
    #    padding of B, and the 2-way parallel split of the stats pass.
    _check(x, weight, bias, tile_budget=2048)

    print("KERNEL_OK")
</pallas_src>

<mosaic_0001>
module attributes {stable_mosaic.version = 11 : i64} {
  func.func @_stats_kernel(%arg0: i32, %arg1: i32, %arg2: memref<8x256xf32, #tpu.memory_space<vmem>>, %arg3: memref<1x1x256xf32, #tpu.memory_space<vmem>>, %arg4: memref<1x1x256xf32, #tpu.memory_space<vmem>>) attributes {dimension_semantics = [#tpu.dimension_semantics<parallel>, #tpu.dimension_semantics<arbitrary>], iteration_bounds = array<i64: 1, 1>, scalar_prefetch = 0 : i64, scratch_operands = 0 : i64, tpu.core_type = #tpu.core_type<tc>, window_params = [{transform_indices = @transform_0, window_bounds = array<i64: 8, 256>}, {transform_indices = @transform_1, window_bounds = array<i64: 1, 1, 256>}, {transform_indices = @transform_2, window_bounds = array<i64: 1, 1, 256>}]} {
    %c0_i32 = arith.constant 0 : i32
    %0 = arith.cmpi eq, %arg1, %c0_i32 : i32
    %1 = arith.extui %0 : i1 to i32
    %c0_i32_0 = arith.constant 0 : i32
    %2 = arith.cmpi ne, %1, %c0_i32_0 : i32
    scf.if %2 {
      %cst_15 = arith.constant 0.000000e+00 : f32
      %17 = vector.broadcast %cst_15 : f32 to vector<1x1x256xf32>
      %c0_16 = arith.constant 0 : index
      %c0_17 = arith.constant 0 : index
      %c0_18 = arith.constant 0 : index
      %18 = vector.load %arg3[%c0_16, %c0_17, %c0_18] : memref<1x1x256xf32, #tpu.memory_space<vmem>>, vector<1x1x256xf32>
      tpu.vector_store %arg3[%c0_16, %c0_17, %c0_18], %17 {strides = array<i32>} : memref<1x1x256xf32, #tpu.memory_space<vmem>>, vector<1x1x256xf32>,
      %cst_19 = arith.constant 0.000000e+00 : f32
      %19 = vector.broadcast %cst_19 : f32 to vector<1x1x256xf32>
      %c0_20 = arith.constant 0 : index
      %c0_21 = arith.constant 0 : index
      %c0_22 = arith.constant 0 : index
      %20 = vector.load %arg4[%c0_20, %c0_21, %c0_22] : memref<1x1x256xf32, #tpu.memory_space<vmem>>, vector<1x1x256xf32>
      tpu.vector_store %arg4[%c0_20, %c0_21, %c0_22], %19 {strides = array<i32>} : memref<1x1x256xf32, #tpu.memory_space<vmem>>, vector<1x1x256xf32>,
    } else {
    }
    %c0 = arith.constant 0 : index
    %c0_1 = arith.constant 0 : index
    %3 = vector.load %arg2[%c0, %c0_1] : memref<8x256xf32, #tpu.memory_space<vmem>>, vector<8x256xf32>
    %c0_2 = arith.constant 0 : index
    %c0_3 = arith.constant 0 : index
    %c0_4 = arith.constant 0 : index
    %4 = vector.load %arg3[%c0_2, %c0_3, %c0_4] : memref<1x1x256xf32, #tpu.memory_space<vmem>>, vector<1x1x256xf32>
    %cst = arith.constant dense<0.000000e+00> : vector<256xf32>
    %5 = vector.multi_reduction <add>, %3, %cst [0] : vector<8x256xf32> to vector<256xf32>
    %6 = vector.shape_cast %5 : vector<256xf32> to vector<1x256xf32>
    %7 = vector.shape_cast %6 : vector<1x256xf32> to vector<1x1x256xf32>
    %8 = arith.addf %4, %7 : vector<1x1x256xf32>
    %c0_5 = arith.constant 0 : index
    %c0_6 = arith.constant 0 : index
    %c0_7 = arith.constant 0 : index
    %9 = vector.load %arg3[%c0_5, %c0_6, %c0_7] : memref<1x1x256xf32, #tpu.memory_space<vmem>>, vector<1x1x256xf32>
    tpu.vector_store %arg3[%c0_5, %c0_6, %c0_7], %8 {strides = array<i32>} : memref<1x1x256xf32, #tpu.memory_space<vmem>>, vector<1x1x256xf32>,
    %c0_8 = arith.constant 0 : index
    %c0_9 = arith.constant 0 : index
    %c0_10 = arith.constant 0 : index
    %10 = vector.load %arg4[%c0_8, %c0_9, %c0_10] : memref<1x1x256xf32, #tpu.memory_space<vmem>>, vector<1x1x256xf32>
    %11 = arith.mulf %3, %3 : vector<8x256xf32>
    %cst_11 = arith.constant dense<0.000000e+00> : vector<256xf32>
    %12 = vector.multi_reduction <add>, %11, %cst_11 [0] : vector<8x256xf32> to vector<256xf32>
    %13 = vector.shape_cast %12 : vector<256xf32> to vector<1x256xf32>
    %14 = vector.shape_cast %13 : vector<1x256xf32> to vector<1x1x256xf32>
    %15 = arith.addf %10, %14 : vector<1x1x256xf32>
    %c0_12 = arith.constant 0 : index
    %c0_13 = arith.constant 0 : index
    %c0_14 = arith.constant 0 : index
    %16 = vector.load %arg4[%c0_12, %c0_13, %c0_14] : memref<1x1x256xf32, #tpu.memory_space<vmem>>, vector<1x1x256xf32>
    tpu.vector_store %arg4[%c0_12, %c0_13, %c0_14], %15 {strides = array<i32>} : memref<1x1x256xf32, #tpu.memory_space<vmem>>, vector<1x1x256xf32>,
    return
  }
  func.func @transform_0(%arg0: i32, %arg1: i32) -> (i32, i32) {
    %c1_i32 = arith.constant 1 : i32
    %0 = arith.muli %arg0, %c1_i32 : i32
    %1 = arith.addi %0, %arg1 : i32
    %c0_i32 = arith.constant 0 : i32
    %c0_i32_0 = arith.constant 0 : i32
    return %1, %c0_i32 : i32, i32
  }
  func.func @transform_1(%arg0: i32, %arg1: i32) -> (i32, i32, i32) {
    %c0_i32 = arith.constant 0 : i32
    %c0_i32_0 = arith.constant 0 : i32
    %c0_i32_1 = arith.constant 0 : i32
    return %arg0, %c0_i32, %c0_i32_0 : i32, i32, i32
  }
  func.func @transform_2(%arg0: i32, %arg1: i32) -> (i32, i32, i32) {
    %c0_i32 = arith.constant 0 : i32
    %c0_i32_0 = arith.constant 0 : i32
    %c0_i32_1 = arith.constant 0 : i32
    return %arg0, %c0_i32, %c0_i32_0 : i32, i32, i32
  }
}

module attributes {stable_mosaic.version = 11 : i64} {
  func.func @_normalize_kernel(%arg0: i32, %arg1: memref<8x256xf32, #tpu.memory_space<vmem>>, %arg2: memref<1x256xf32, #tpu.memory_space<vmem>>, %arg3: memref<1x256xf32, #tpu.memory_space<vmem>>, %arg4: memref<8x256xf32, #tpu.memory_space<vmem>>) attributes {dimension_semantics = [#tpu.dimension_semantics<parallel>], iteration_bounds = array<i64: 1>, scalar_prefetch = 0 : i64, scratch_operands = 0 : i64, tpu.core_type = #tpu.core_type<tc>, window_params = [{transform_indices = @transform_0, window_bounds = array<i64: 8, 256>}, {pipeline_mode = #tpu.pipeline_mode<synchronous>, transform_indices = @transform_1, window_bounds = array<i64: 1, 256>}, {pipeline_mode = #tpu.pipeline_mode<synchronous>, transform_indices = @transform_2, window_bounds = array<i64: 1, 256>}, {transform_indices = @transform_3, window_bounds = array<i64: 8, 256>}]} {
    %c0 = arith.constant 0 : index
    %c0_0 = arith.constant 0 : index
    %0 = vector.load %arg1[%c0, %c0_0] : memref<8x256xf32, #tpu.memory_space<vmem>>, vector<8x256xf32>
    %c0_1 = arith.constant 0 : index
    %c0_2 = arith.constant 0 : index
    %1 = vector.load %arg2[%c0_1, %c0_2] : memref<1x256xf32, #tpu.memory_space<vmem>>, vector<1x256xf32>
    %2 = vector.broadcast %1 : vector<1x256xf32> to vector<8x256xf32>
    %3 = arith.mulf %0, %2 : vector<8x256xf32>
    %c0_3 = arith.constant 0 : index
    %c0_4 = arith.constant 0 : index
    %4 = vector.load %arg3[%c0_3, %c0_4] : memref<1x256xf32, #tpu.memory_space<vmem>>, vector<1x256xf32>
    %5 = vector.broadcast %4 : vector<1x256xf32> to vector<8x256xf32>
    %6 = arith.addf %3, %5 : vector<8x256xf32>
    %c0_5 = arith.constant 0 : index
    %c0_6 = arith.constant 0 : index
    %7 = vector.load %arg4[%c0_5, %c0_6] : memref<8x256xf32, #tpu.memory_space<vmem>>, vector<8x256xf32>
    tpu.vector_store %arg4[%c0_5, %c0_6], %6 {strides = array<i32>} : memref<8x256xf32, #tpu.memory_space<vmem>>, vector<8x256xf32>,
    return
  }
  func.func @transform_0(%arg0: i32) -> (i32, i32) {
    %c0_i32 = arith.constant 0 : i32
    %c0_i32_0 = arith.constant 0 : i32
    return %arg0, %c0_i32 : i32, i32
  }
  func.func @transform_1(%arg0: i32) -> (i32, i32) {
    %c0_i32 = arith.constant 0 : i32
    %c0_i32_0 = arith.constant 0 : i32
    %c0_i32_1 = arith.constant 0 : i32
    return %c0_i32, %c0_i32_0 : i32, i32
  }
  func.func @transform_2(%arg0: i32) -> (i32, i32) {
    %c0_i32 = arith.constant 0 : i32
    %c0_i32_0 = arith.constant 0 : i32
    %c0_i32_1 = arith.constant 0 : i32
    return %c0_i32, %c0_i32_0 : i32, i32
  }
  func.func @transform_3(%arg0: i32) -> (i32, i32) {
    %c0_i32 = arith.constant 0 : i32
    %c0_i32_0 = arith.constant 0 : i32
    return %arg0, %c0_i32 : i32, i32
  }
}

</mosaic_0001>

<llo_original>
// kernel: batch_norm_2d1.2
$region0: #{batch_norm_2d1.2}
  #allocation0 [shape = 'u32[]', space=smem, size = 0x4, offset = 0x4, fixed_abs, tag = 'smem constant byte address 0x4 - core index']
  #allocation1 [shape = 'u32[144,128]{1,0:T(1,128)}', space=vmem, size = 0x12000, scoped, tag = 'internal scratch']
  %s0 = inlined_call_operand.vmem [shape: f32[8,256], index: 0, kind: input, shape index: {}]
  %s1 = inlined_call_operand.vmem [shape: f32[1,1,256], index: 1, kind: output, shape index: {0}]
  %s2 = inlined_call_operand.vmem [shape: f32[1,1,256], index: 2, kind: output, shape index: {1}]
  %3 = xla_tuple %s1, %s2
  %s4 = sld [smem:[#allocation0]]
  $region26: #{batch_norm_2d1.2} parent=0
    _
  %s6 = ssub.s32 1, %s4
  %s7 = scalar_select 0, %s6, %s4
  // Predicated region
  $region2: #{batch_norm_2d1.2} parent=0 // pred_check
    _
  $region3: #{batch_norm_2d1.2} parent=0 // pred_check_branch
    %9 = sbr.rel (0) target = $region5
  $region4: #{batch_norm_2d1.2} parent=0 // pred_region
    %s10 = sadd.s32 0, 0
    %p11 = scmp.lt.s32.totalorder %s10, 0
    %s12 = scalar_select %p11, %s10, 0
    %s13 = smul.addr %s12, 2
    %s14 = smul.addr %s13, 8
    %s15 = scalar_lea.vmem %s0, %s14
    %s16 = sadd.s32 0, 0
  $region5: #{batch_norm_2d1.2} parent=0 // pred_fallthru
    _
  %s17 = sadd.s32 0, 0
  %p18 = scmp.lt.s32.totalorder %s17, 0
  %s19 = scalar_select %p18, %s17, 0
  %s20 = smul.addr %s19, 2
  %s21 = smul.addr %s20, 8
  %s22 = scalar_lea.vmem %s0, %s21
  %s23 = sadd.s32 0, 0
  %p24 = scmp.lt.s32.totalorder %s23, 0
  %s25 = scalar_select %p24, %s23, 0
  %s26 = smul.addr %s25, 2
  %s27 = smul.addr %s26, 8
  %s28 = scalar_lea.vmem %s0, %s27
  %s29 = sadd.s32 0, 0
  %p30 = scmp.eq.s32.totalorder 0, 0
  // Predicated region
  $region6: #{batch_norm_2d1.2} parent=0 // pred_check
    %p31 = pneg %p30
  $region7: #{batch_norm_2d1.2} parent=0 // pred_check_branch
    %33 = sbr.rel (%p31) target = $region9
  $region8: #{batch_norm_2d1.2} parent=0 // pred_region
    %v34 = vlaneseq
    %vm35 = vcmp.ge.s32.totalorder %v34, 0
    %vm36 = vcmp.lt.s32.totalorder %v34, 256
    %vm37 = vmand %vm35, %vm36
    %38 = vst.msk [vmem:[%s1] sm:$0x3] %vm37, 0.0
    %39 = vst.msk [vmem:[%s2] sm:$0x3] %vm37, 0.0
  $region9: #{batch_norm_2d1.2} parent=0 // pred_fallthru
    _
  %v40 = vld [vmem:[%s28] sm:$0xff]
  %v41 = vld [vmem:[%s28 + $0x8] sm:$0xff]
  %v42 = vld [vmem:[%s1] sm:$0x3]
  %v43 = vrot.slane %v40, 4
  %v44 = vadd.f32 %v40, %v43
  %v45 = vrot.slane %v44, 2
  %v46 = vadd.f32 %v44, %v45
  %v47 = vrot.slane %v46, 1
  %v48 = vadd.f32 %v46, %v47
  %v49 = vrot.slane %v41, 4
  %v50 = vadd.f32 %v41, %v49
  %v51 = vrot.slane %v50, 2
  %v52 = vadd.f32 %v50, %v51
  %v53 = vrot.slane %v52, 1
  %v54 = vadd.f32 %v52, %v53
  %v57 = vcombine.low %v48, %v54
  %v59 = vunpack.c.l.s4 1966171168
  %v60 = vunpack.c.0.s8 %v59
  %v61 = vlaneseq
  %v62 = vshrl.u32 %v61, 7
  %v63 = vsub.s32 %v60, %v62
  %v64 = vrot.slane %v57, %v63
  %v66 = vunpack.c.l.s4 1966171168
  %v67 = vunpack.c.0.s8 %v66
  %v68 = vlaneseq
  %v69 = vshrl.u32 %v68, 7
  %v70 = vsub.s32 %v67, %v69
  %v71 = vrot.slane %v64, %v70
  %v73 = vadd.f32 %v42, %v71
  %v74 = vlaneseq
  %vm75 = vcmp.ge.s32.totalorder %v74, 0
  %vm76 = vcmp.lt.s32.totalorder %v74, 256
  %vm77 = vmand %vm75, %vm76
  %78 = vst.msk [vmem:[%s1] sm:$0x3] %vm77, %v73
  %v79 = vld [vmem:[%s2] sm:$0x3]
  %v80 = vmul.f32 %v40, %v40
  %v81 = vmul.f32 %v41, %v41
  %v82 = vrot.slane %v80, 4
  %v83 = vadd.f32 %v80, %v82
  %v84 = vrot.slane %v83, 2
  %v85 = vadd.f32 %v83, %v84
  %v86 = vrot.slane %v85, 1
  %v87 = vadd.f32 %v85, %v86
  %v88 = vrot.slane %v81, 4
  %v89 = vadd.f32 %v81, %v88
  %v90 = vrot.slane %v89, 2
  %v91 = vadd.f32 %v89, %v90
  %v92 = vrot.slane %v91, 1
  %v93 = vadd.f32 %v91, %v92
  %v96 = vcombine.low %v87, %v93
  %v98 = vunpack.c.l.s4 1966171168
  %v99 = vunpack.c.0.s8 %v98
  %v100 = vlaneseq
  %v101 = vshrl.u32 %v100, 7
  %v102 = vsub.s32 %v99, %v101
  %v103 = vrot.slane %v96, %v102
  %v105 = vunpack.c.l.s4 1966171168
  %v106 = vunpack.c.0.s8 %v105
  %v107 = vlaneseq
  %v108 = vshrl.u32 %v107, 7
  %v109 = vsub.s32 %v106, %v108
  %v110 = vrot.slane %v103, %v109
  %v112 = vadd.f32 %v79, %v110
  %113 = vst.msk [vmem:[%s2] sm:$0x3] %vm77, %v112
  // Predicated region
  $region10: #{batch_norm_2d1.2} parent=0 // pred_check
    _
  $region11: #{batch_norm_2d1.2} parent=0 // pred_check_branch
    %115 = sbr.rel (0) target = $region13
  $region12: #{batch_norm_2d1.2} parent=0 // pred_region
    _
  $region13: #{batch_norm_2d1.2} parent=0 // pred_fallthru
    _
  // Predicated region
  $region14: #{batch_norm_2d1.2} parent=0 // pred_check
    _
  $region15: #{batch_norm_2d1.2} parent=0 // pred_check_branch
    %117 = sbr.rel (0) target = $region17
  $region16: #{batch_norm_2d1.2} parent=0 // pred_region
    _
  $region17: #{batch_norm_2d1.2} parent=0 // pred_fallthru
    _
  // Predicated region
  $region18: #{batch_norm_2d1.2} parent=0 // pred_check
    _
  $region19: #{batch_norm_2d1.2} parent=0 // pred_check_branch
    %119 = sbr.rel (0) target = $region21
  $region20: #{batch_norm_2d1.2} parent=0 // pred_region
    _
  $region21: #{batch_norm_2d1.2} parent=0 // pred_fallthru
    _
  // Predicated region
  $region22: #{batch_norm_2d1.2} parent=0 // pred_check
    _
  $region23: #{batch_norm_2d1.2} parent=0 // pred_check_branch
    %121 = sbr.rel (0) target = $region25
  $region24: #{batch_norm_2d1.2} parent=0 // pred_region
    _
  $region25: #{batch_norm_2d1.2} parent=0 // pred_fallthru
    _

// kernel: batch_norm_2d1.3
$region0: #{batch_norm_2d1.3}
  #allocation0 [shape = 'u32[]', space=smem, size = 0x4, offset = 0x4, fixed_abs, tag = 'smem constant byte address 0x4 - core index']
  #allocation1 [shape = 'u32[144,128]{1,0:T(1,128)}', space=vmem, size = 0x12000, scoped, tag = 'internal scratch']
  %s0 = inlined_call_operand.vmem [shape: f32[8,256], index: 0, kind: input, shape index: {}]
  %s1 = inlined_call_operand.vmem [shape: f32[1,256], index: 1, kind: input, shape index: {}]
  %s2 = inlined_call_operand.vmem [shape: f32[1,256], index: 2, kind: input, shape index: {}]
  %s3 = inlined_call_operand.vmem [shape: f32[8,256], index: 3, kind: output, shape index: {}]
  %s4 = sld [smem:[#allocation0]]
  $region22: #{batch_norm_2d1.3} parent=0
    _
  %s6 = ssub.s32 1, %s4
  %s7 = scalar_select 0, %s6, %s4
  // Predicated region
  $region2: #{batch_norm_2d1.3} parent=0 // pred_check
    _
  $region3: #{batch_norm_2d1.3} parent=0 // pred_check_branch
    %9 = sbr.rel (0) target = $region5
  $region4: #{batch_norm_2d1.3} parent=0 // pred_region
    _
  $region5: #{batch_norm_2d1.3} parent=0 // pred_fallthru
    _
  // Predicated region
  $region6: #{batch_norm_2d1.3} parent=0 // pred_check
    _
  $region7: #{batch_norm_2d1.3} parent=0 // pred_check_branch
    %11 = sbr.rel (0) target = $region9
  $region8: #{batch_norm_2d1.3} parent=0 // pred_region
    _
  $region9: #{batch_norm_2d1.3} parent=0 // pred_fallthru
    _
  // Predicated region
  $region10: #{batch_norm_2d1.3} parent=0 // pred_check
    _
  $region11: #{batch_norm_2d1.3} parent=0 // pred_check_branch
    %13 = sbr.rel (0) target = $region13
  $region12: #{batch_norm_2d1.3} parent=0 // pred_region
    _
  $region13: #{batch_norm_2d1.3} parent=0 // pred_fallthru
    _
  %v14 = vld [vmem:[%s0] sm:$0xff]
  %v15 = vld [vmem:[%s0 + $0x8] sm:$0xff]
  %v16 = vld [vmem:[%s1] sm:$0x3]
  %v18 = vlaneseq
  %v19 = vshrl.u32 %v18, 7
  %v20 = vsub.s32 0, %v19
  %v21 = vrot.slane %v16, %v20
  %v22 = vlaneseq
  %v23 = vshrl.u32 %v22, 7
  %v24 = vsub.s32 1, %v23
  %v25 = vrot.slane %v16, %v24
  %v28 = vmul.f32 %v14, %v21
  %v29 = vmul.f32 %v15, %v25
  %v30 = vld [vmem:[%s2] sm:$0x3]
  %v32 = vlaneseq
  %v33 = vshrl.u32 %v32, 7
  %v34 = vsub.s32 0, %v33
  %v35 = vrot.slane %v30, %v34
  %v36 = vlaneseq
  %v37 = vshrl.u32 %v36, 7
  %v38 = vsub.s32 1, %v37
  %v39 = vrot.slane %v30, %v38
  %v42 = vadd.f32 %v28, %v35
  %v43 = vadd.f32 %v29, %v39
  %44 = vst [vmem:[%s3] sm:$0xff] %v42
  %45 = vst [vmem:[%s3 + $0x8] sm:$0xff] %v43
  // Predicated region
  $region14: #{batch_norm_2d1.3} parent=0 // pred_check
    _
  $region15: #{batch_norm_2d1.3} parent=0 // pred_check_branch
    %47 = sbr.rel (0) target = $region17
  $region16: #{batch_norm_2d1.3} parent=0 // pred_region
    _
  $region17: #{batch_norm_2d1.3} parent=0 // pred_fallthru
    _
  // Predicated region
  $region18: #{batch_norm_2d1.3} parent=0 // pred_check
    _
  $region19: #{batch_norm_2d1.3} parent=0 // pred_check_branch
    %49 = sbr.rel (0) target = $region21
  $region20: #{batch_norm_2d1.3} parent=0 // pred_region
    _
  $region21: #{batch_norm_2d1.3} parent=0 // pred_fallthru
    _

</llo_original>
